<compile_context>
chip_gen: v6e
topology: v6e:2x2x1
jax: 0.10.0
libtpu: 0.0.40
codegen_flags: <defaults>
</compile_context>

<pallas_src>
from functools import partial
from math import log2

import jax
import jax.numpy as jnp
import numpy as np
from jax import lax
from jax.experimental import pallas as pl
from jax.experimental.pallas import tpu as pltpu


def _leaky(x, slope):
    return jnp.where(x >= 0, x, slope * x)


# ---------------------------------------------------------------------------
# Fused per-stage kernel: 3x3 conv + LeakyReLU + polyphase stride-2 deconv
# + LeakyReLU.  One batch element per grid step; everything is banded matmuls
# over row bands of a row-padded VMEM scratch.
# ---------------------------------------------------------------------------
def _stage_kernel(x_ref, m1_ref, b1_ref, m2_ref, b2_ref, o_ref,
                  pad1_ref, pad2_ref, *, H, W, C, neg_slope):
    """
    x_ref   : (H, W*C)        input activation (NHWC, channels on lanes)
    m1_ref  : (3*W*C, W*C)    banded 3x3-conv weights, one (W*C, W*C) band / kh
    b1_ref  : (1, W*C)        conv bias tiled along w
    m2_ref  : (3*W*C, 4*W*C)  banded polyphase ConvTranspose weights, one band
                              per dh; columns ordered (rh, 2w+rw, co)
    b2_ref  : (1, 4*W*C)
    o_ref   : (H, 4*W*C)      output slab; row a holds out rows (2a, 2a+1)
    pad1_ref: (H+2, W*C)      row-padded input scratch  (rows 0, H+1 are zero)
    pad2_ref: (H+2, W*C)      row-padded conv1-output scratch
    """
    WC = W * C
    zrow = jnp.zeros((1, WC), jnp.float32)

    # Zero only the 1-row halos (interior is fully overwritten below).
    pad1_ref[0:1, :] = zrow
    pad1_ref[H + 1:H + 2, :] = zrow
    pad2_ref[0:1, :] = zrow
    pad2_ref[H + 1:H + 2, :] = zrow

    # ---- ConvolutionBlock: 3x3 same conv + LeakyReLU (3 banded MXU dots) ---
    pad1_ref[1:H + 1, :] = x_ref[...].astype(jnp.float32)
    acc1 = jnp.zeros((H, WC), jnp.float32)
    for kh in range(3):
        band = pad1_ref[kh:kh + H, :]
        mk = m1_ref[kh * WC:(kh + 1) * WC, :]
        acc1 = acc1 + jnp.dot(band, mk, preferred_element_type=jnp.float32)
    y = _leaky(acc1 + b1_ref[...], neg_slope)

    # conv1 result goes straight into the second padded scratch's interior.
    pad2_ref[1:H + 1, :] = y

    # ---- ConvTranspose2d(stride=2): polyphase, 3 banded MXU dots -----------
    # Column order (rh, 2w+rw, co) already de-interleaves the 2x2 phases.
    acc2 = jnp.zeros((H, 4 * WC), jnp.float32)
    for dh in range(3):
        band = pad2_ref[dh:dh + H, :]
        mk = m2_ref[dh * WC:(dh + 1) * WC, :]
        acc2 = acc2 + jnp.dot(band, mk, preferred_element_type=jnp.float32)

    # Lane-dense (H, 4*W*C) store: unmasked, multiple of 128 at these sizes.
    o_ref[...] = _leaky(acc2 + b2_ref[...], neg_slope).astype(o_ref.dtype)


def _upscale_stage(x_nhwc, sp, neg_slope):
    N, H, W, C = x_nhwc.shape
    assert sp["m1"].shape == (3 * W * C, W * C), \
        "prepared weights do not match this stage's spatial width"
    x2d = x_nhwc.reshape(N, H, W * C)             # memory-identical, lane-dense
    kernel = partial(_stage_kernel, H=H, W=W, C=C, neg_slope=neg_slope)
    out_flat = pl.pallas_call(
        kernel,
        out_shape=jax.ShapeDtypeStruct((N, H, 4 * W * C), x_nhwc.dtype),
        grid=(N,),
        in_specs=[
            pl.BlockSpec((None, H, W * C), lambda n: (n, 0, 0)),
            pl.BlockSpec((3 * W * C, W * C), lambda n: (0, 0)),
            pl.BlockSpec((1, W * C), lambda n: (0, 0)),
            pl.BlockSpec((3 * W * C, 4 * W * C), lambda n: (0, 0)),
            pl.BlockSpec((1, 4 * W * C), lambda n: (0, 0)),
        ],
        out_specs=pl.BlockSpec((None, H, 4 * W * C), lambda n: (n, 0, 0)),
        scratch_shapes=[
            pltpu.VMEM((H + 2, W * C), jnp.float32),   # row-padded input
            pltpu.VMEM((H + 2, W * C), jnp.float32),   # row-padded conv1 out
        ],
        compiler_params=pltpu.CompilerParams(
            dimension_semantics=("parallel",),
            vmem_limit_bytes=32 * 1024 * 1024),
    )(x2d, sp["m1"], sp["b1"], sp["m2"], sp["b2"])

    # Memory-identical reshape: row a, lane (rh,2w+rw,co) -> (2a+rh, 2w+rw, co)
    return out_flat.reshape(N, 2 * H, 2 * W, C)


# ---------------------------------------------------------------------------
# Parameters: raw (PyTorch layout) init + one-time preprocessing (hoisted).
# ---------------------------------------------------------------------------
def init_params(key, channels, scale=2, mode=1):
    k_size = 4 if mode == 1 else 6
    num_stages = int(log2(scale))
    params = []
    for _ in range(num_stages):
        k1, k2, k3, k4, key = jax.random.split(key, 5)
        params.append(dict(
            # PyTorch Conv2d weight layout: (Cout, Cin, K, K)
            conv_w=jax.random.normal(k1, (channels, channels, 3, 3), jnp.float32) * 0.1,
            conv_b=jax.random.normal(k2, (channels,), jnp.float32) * 0.01,
            # PyTorch ConvTranspose2d weight layout: (Cin, Cout, K, K)
            tconv_w=jax.random.normal(k3, (channels, channels, k_size, k_size), jnp.float32) * 0.1,
            tconv_b=jax.random.normal(k4, (channels,), jnp.float32) * 0.01,
        ))
    return params


def _fold_tconv_polyphase(tconv_w, k_size, p_size):
    """ConvTranspose2d(k, stride=2, pad=p) as 4 polyphase 3x3 taps over the
    pad-1 intermediate:  out[2a+rh, 2b+rw, co] =
        sum_{dh,dw,ci} ypad[a+dh, b+dw, ci] * w2[dh,dw,ci,rh,rw,co]
    with kh = rh + p + 2 - 2*dh, kw analogous (valid taps only)."""
    wt = np.asarray(tconv_w)                      # (Cin, Cout, k, k)
    c_in, c_out = wt.shape[0], wt.shape[1]
    w2 = np.zeros((3, 3, c_in, 2, 2, c_out), np.float32)
    for rh in range(2):
        for rw in range(2):
            for dh in range(3):
                for dw in range(3):
                    kh = rh + p_size + 2 - 2 * dh
                    kw = rw + p_size + 2 - 2 * dw
                    if 0 <= kh < k_size and 0 <= kw < k_size:
                        w2[dh, dw, :, rh, rw, :] = wt[:, :, kh, kw]
    return w2


def _banded_conv3x3(w_hwio, Wd):
    """3x3 same-conv on lane-folded rows as 3 banded matrices (one per kh):
       M[kh][(w+kw-1)*C+ci, w*C+co] = w_hwio[kh,kw,ci,co] (w+kw-1 in range).
       Zero w-padding is implicit in the band limits."""
    C = w_hwio.shape[2]
    WC = Wd * C
    M = np.zeros((3, WC, WC), np.float32)
    for kh in range(3):
        for w in range(Wd):
            for kw in range(3):
                wp = w + kw - 1
                if 0 <= wp < Wd:
                    M[kh, wp * C:(wp + 1) * C, w * C:(w + 1) * C] = w_hwio[kh, kw]
    return M.reshape(3 * WC, WC)


def _banded_deconv(w2fold, Wd):
    """Polyphase deconv as 3 banded matrices (one per dh) whose column order
       (rh, 2w+rw, co) performs the 2x phase interleave inside the matmul:
       M[dh][(w+dw-1)*C+ci, rh*2WC+(2w+rw)*C+co] = w2fold[dh,dw,ci,rh,rw,co]."""
    C = w2fold.shape[2]
    WC = Wd * C
    M = np.zeros((3, WC, 4 * WC), np.float32)
    for dh in range(3):
        for w in range(Wd):
            for dw in range(3):
                wp = w + dw - 1
                if not (0 <= wp < Wd):
                    continue
                for rh in range(2):
                    for rw in range(2):
                        c0 = rh * (2 * WC) + (2 * w + rw) * C
                        M[dh, wp * C:(wp + 1) * C, c0:c0 + C] = \
                            w2fold[dh, dw, :, rh, rw, :]
    return M.reshape(3 * WC, 4 * WC)


def prepare_params(params, channels, width, mode=1):
    """One-time weight preprocessing (hoisted out of the forward path).
    `width` is the spatial W of the FIRST stage's input (doubles per stage)."""
    if mode == 1:
        k_size, p_size = 4, 1
    elif mode == 2:
        k_size, p_size = 6, 2
    else:
        raise ValueError("wrong mode parameters")
    C = channels
    prepped = []
    for s_idx, st in enumerate(params):
        Wd = width * (2 ** s_idx)
        w_hwio = np.transpose(np.asarray(st["conv_w"]), (2, 3, 1, 0))  # (kh,kw,ci,co)
        w2f = _fold_tconv_polyphase(st["tconv_w"], k_size, p_size)
        prepped.append(dict(
            m1=jnp.asarray(_banded_conv3x3(w_hwio, Wd)),
            b1=jnp.asarray(np.tile(np.asarray(st["conv_b"]), Wd).reshape(1, Wd * C)),
            m2=jnp.asarray(_banded_deconv(w2f, Wd)),
            b2=jnp.asarray(np.tile(np.asarray(st["tconv_b"]), 4 * Wd).reshape(1, 4 * Wd * C)),
        ))
    return prepped


def transpose_upscale_forward(x_nchw, prepped_params, neg_slope=0.01):
    x = jnp.transpose(x_nchw, (0, 2, 3, 1))       # NCHW -> NHWC (API boundary)
    for sp in prepped_params:
        x = _upscale_stage(x, sp, neg_slope)      # stays NHWC between stages
    return jnp.transpose(x, (0, 3, 1, 2))         # NHWC -> NCHW


# ---------------- pure-JAX reference (numerical sanity check) --------------
def reference_forward(x_nchw, params, mode=1, neg_slope=0.01):
    k_size, p_size = (4, 1) if mode == 1 else (6, 2)
    x = jnp.transpose(x_nchw, (0, 2, 3, 1))
    dn = ("NHWC", "HWIO", "NHWC")
    for stage in params:
        w3 = jnp.transpose(stage["conv_w"], (2, 3, 1, 0))
        y = lax.conv_general_dilated(x, w3, (1, 1), [(1, 1), (1, 1)],
                                     dimension_numbers=dn)
        y = _leaky(y + stage["conv_b"][None, None, None, :], neg_slope)
        wt = jnp.transpose(stage["tconv_w"][:, :, ::-1, ::-1], (2, 3, 0, 1))
        pad = k_size - 1 - p_size
        y2 = lax.conv_general_dilated(y, wt, (1, 1), [(pad, pad), (pad, pad)],
                                      lhs_dilation=(2, 2), dimension_numbers=dn)
        x = _leaky(y2 + stage["tconv_b"][None, None, None, :], neg_slope)
    return jnp.transpose(x, (0, 3, 1, 2))


if __name__ == "__main__":
    key = jax.random.PRNGKey(0)
    kx, kp = jax.random.split(key)

    batch, channels, spatial, scale, mode = 2, 4, 16, 2, 1
    x = jax.random.normal(kx, (batch, channels, spatial, spatial), jnp.float32)
    params = init_params(kp, channels, scale=scale, mode=mode)
    prepped = prepare_params(params, channels, width=spatial, mode=mode)

    out = transpose_upscale_forward(x, prepped)
    out = jax.block_until_ready(out)
    assert out.shape == (batch, channels, spatial * scale, spatial * scale), out.shape

    ref = jax.block_until_ready(reference_forward(x, params, mode=mode))
    assert jnp.allclose(out, ref, atol=1e-4, rtol=1e-4), \
        float(jnp.max(jnp.abs(out - ref)))

    print("KERNEL_OK")
</pallas_src>

<mosaic_0001>
module attributes {stable_mosaic.version = 11 : i64} {
  func.func @_stage_kernel(%arg0: i32, %arg1: memref<1x16x64xf32, #tpu.memory_space<vmem>>, %arg2: memref<192x64xf32, #tpu.memory_space<vmem>>, %arg3: memref<1x64xf32, #tpu.memory_space<vmem>>, %arg4: memref<192x256xf32, #tpu.memory_space<vmem>>, %arg5: memref<1x256xf32, #tpu.memory_space<vmem>>, %arg6: memref<1x16x256xf32, #tpu.memory_space<vmem>>, %arg7: memref<18x64xf32, #tpu.memory_space<vmem>>, %arg8: memref<18x64xf32, #tpu.memory_space<vmem>>) attributes {dimension_semantics = [#tpu.dimension_semantics<parallel>], iteration_bounds = array<i64: 2>, scalar_prefetch = 0 : i64, scratch_operands = 2 : i64, tpu.core_type = #tpu.core_type<tc>, window_params = [{transform_indices = @transform_0, window_bounds = array<i64: 1, 16, 64>}, {pipeline_mode = #tpu.pipeline_mode<synchronous>, transform_indices = @transform_1, window_bounds = array<i64: 192, 64>}, {pipeline_mode = #tpu.pipeline_mode<synchronous>, transform_indices = @transform_2, window_bounds = array<i64: 1, 64>}, {pipeline_mode = #tpu.pipeline_mode<synchronous>, transform_indices = @transform_3, window_bounds = array<i64: 192, 256>}, {pipeline_mode = #tpu.pipeline_mode<synchronous>, transform_indices = @transform_4, window_bounds = array<i64: 1, 256>}, {transform_indices = @transform_5, window_bounds = array<i64: 1, 16, 256>}]} {
    %cst = arith.constant 0.000000e+00 : f32
    %0 = vector.broadcast %cst : f32 to vector<1x64xf32>
    %c0 = arith.constant 0 : index
    %c0_0 = arith.constant 0 : index
    %1 = vector.load %arg7[%c0, %c0_0] : memref<18x64xf32, #tpu.memory_space<vmem>>, vector<1x64xf32>
    tpu.vector_store %arg7[%c0, %c0_0], %0 {strides = array<i32>} : memref<18x64xf32, #tpu.memory_space<vmem>>, vector<1x64xf32>,
    %c17 = arith.constant 17 : index
    %c0_1 = arith.constant 0 : index
    %2 = vector.load %arg7[%c17, %c0_1] : memref<18x64xf32, #tpu.memory_space<vmem>>, vector<1x64xf32>
    tpu.vector_store %arg7[%c17, %c0_1], %0 {strides = array<i32>} : memref<18x64xf32, #tpu.memory_space<vmem>>, vector<1x64xf32>,
    %c0_2 = arith.constant 0 : index
    %c0_3 = arith.constant 0 : index
    %3 = vector.load %arg8[%c0_2, %c0_3] : memref<18x64xf32, #tpu.memory_space<vmem>>, vector<1x64xf32>
    tpu.vector_store %arg8[%c0_2, %c0_3], %0 {strides = array<i32>} : memref<18x64xf32, #tpu.memory_space<vmem>>, vector<1x64xf32>,
    %c17_4 = arith.constant 17 : index
    %c0_5 = arith.constant 0 : index
    %4 = vector.load %arg8[%c17_4, %c0_5] : memref<18x64xf32, #tpu.memory_space<vmem>>, vector<1x64xf32>
    tpu.vector_store %arg8[%c17_4, %c0_5], %0 {strides = array<i32>} : memref<18x64xf32, #tpu.memory_space<vmem>>, vector<1x64xf32>,
    %c0_6 = arith.constant 0 : index
    %c0_7 = arith.constant 0 : index
    %c0_8 = arith.constant 0 : index
    %5 = vector.load %arg1[%c0_6, %c0_7, %c0_8] : memref<1x16x64xf32, #tpu.memory_space<vmem>>, vector<1x16x64xf32>
    %6 = vector.shape_cast %5 : vector<1x16x64xf32> to vector<16x64xf32>
    %c1 = arith.constant 1 : index
    %c0_9 = arith.constant 0 : index
    %7 = vector.load %arg7[%c1, %c0_9] : memref<18x64xf32, #tpu.memory_space<vmem>>, vector<16x64xf32>
    tpu.vector_store %arg7[%c1, %c0_9], %6 {strides = array<i32>} : memref<18x64xf32, #tpu.memory_space<vmem>>, vector<16x64xf32>,
    %cst_10 = arith.constant 0.000000e+00 : f32
    %8 = vector.broadcast %cst_10 : f32 to vector<16x64xf32>
    %c0_11 = arith.constant 0 : index
    %c0_12 = arith.constant 0 : index
    %9 = vector.load %arg7[%c0_11, %c0_12] : memref<18x64xf32, #tpu.memory_space<vmem>>, vector<16x64xf32>
    %c0_13 = arith.constant 0 : index
    %c0_14 = arith.constant 0 : index
    %10 = vector.load %arg2[%c0_13, %c0_14] : memref<192x64xf32, #tpu.memory_space<vmem>>, vector<64x64xf32>
    %cst_15 = arith.constant dense<0.000000e+00> : vector<16x64xf32>
    %11 = tpu.matmul %9, %10, %cst_15 {dimension_numbers = #tpu.dot_dimension_numbers<[1], [0], [0], [1], [0, 0, 1, 1], [], []>} : vector<16x64xf32>, vector<64x64xf32>, vector<16x64xf32> -> vector<16x64xf32>
    %12 = arith.addf %8, %11 : vector<16x64xf32>
    %c1_16 = arith.constant 1 : index
    %c0_17 = arith.constant 0 : index
    %13 = vector.load %arg7[%c1_16, %c0_17] : memref<18x64xf32, #tpu.memory_space<vmem>>, vector<16x64xf32>
    %c64 = arith.constant 64 : index
    %c0_18 = arith.constant 0 : index
    %14 = vector.load %arg2[%c64, %c0_18] : memref<192x64xf32, #tpu.memory_space<vmem>>, vector<64x64xf32>
    %cst_19 = arith.constant dense<0.000000e+00> : vector<16x64xf32>
    %15 = tpu.matmul %13, %14, %cst_19 {dimension_numbers = #tpu.dot_dimension_numbers<[1], [0], [0], [1], [0, 0, 1, 1], [], []>} : vector<16x64xf32>, vector<64x64xf32>, vector<16x64xf32> -> vector<16x64xf32>
    %16 = arith.addf %12, %15 : vector<16x64xf32>
    %c2 = arith.constant 2 : index
    %c0_20 = arith.constant 0 : index
    %17 = vector.load %arg7[%c2, %c0_20] : memref<18x64xf32, #tpu.memory_space<vmem>>, vector<16x64xf32>
    %c128 = arith.constant 128 : index
    %c0_21 = arith.constant 0 : index
    %18 = vector.load %arg2[%c128, %c0_21] : memref<192x64xf32, #tpu.memory_space<vmem>>, vector<64x64xf32>
    %cst_22 = arith.constant dense<0.000000e+00> : vector<16x64xf32>
    %19 = tpu.matmul %17, %18, %cst_22 {dimension_numbers = #tpu.dot_dimension_numbers<[1], [0], [0], [1], [0, 0, 1, 1], [], []>} : vector<16x64xf32>, vector<64x64xf32>, vector<16x64xf32> -> vector<16x64xf32>
    %20 = arith.addf %16, %19 : vector<16x64xf32>
    %c0_23 = arith.constant 0 : index
    %c0_24 = arith.constant 0 : index
    %21 = vector.load %arg3[%c0_23, %c0_24] : memref<1x64xf32, #tpu.memory_space<vmem>>, vector<1x64xf32>
    %22 = vector.broadcast %21 : vector<1x64xf32> to vector<16x64xf32>
    %23 = arith.addf %20, %22 : vector<16x64xf32>
    %cst_25 = arith.constant 0.000000e+00 : f32
    %24 = vector.broadcast %cst_25 : f32 to vector<16x64xf32>
    %25 = arith.cmpf oge, %23, %24 : vector<16x64xf32>
    %cst_26 = arith.constant 0.00999999977 : f32
    %26 = vector.broadcast %cst_26 : f32 to vector<16x64xf32>
    %27 = arith.mulf %26, %23 : vector<16x64xf32>
    %28 = arith.select %25, %23, %27 : vector<16x64xi1>, vector<16x64xf32>
    %c1_27 = arith.constant 1 : index
    %c0_28 = arith.constant 0 : index
    %29 = vector.load %arg8[%c1_27, %c0_28] : memref<18x64xf32, #tpu.memory_space<vmem>>, vector<16x64xf32>
    tpu.vector_store %arg8[%c1_27, %c0_28], %28 {strides = array<i32>} : memref<18x64xf32, #tpu.memory_space<vmem>>, vector<16x64xf32>,
    %cst_29 = arith.constant 0.000000e+00 : f32
    %30 = vector.broadcast %cst_29 : f32 to vector<16x256xf32>
    %c0_30 = arith.constant 0 : index
    %c0_31 = arith.constant 0 : index
    %31 = vector.load %arg8[%c0_30, %c0_31] : memref<18x64xf32, #tpu.memory_space<vmem>>, vector<16x64xf32>
    %c0_32 = arith.constant 0 : index
    %c0_33 = arith.constant 0 : index
    %32 = vector.load %arg4[%c0_32, %c0_33] : memref<192x256xf32, #tpu.memory_space<vmem>>, vector<64x256xf32>
    %cst_34 = arith.constant dense<0.000000e+00> : vector<16x256xf32>
    %33 = tpu.matmul %31, %32, %cst_34 {dimension_numbers = #tpu.dot_dimension_numbers<[1], [0], [0], [1], [0, 0, 1, 1], [], []>} : vector<16x64xf32>, vector<64x256xf32>, vector<16x256xf32> -> vector<16x256xf32>
    %34 = arith.addf %30, %33 : vector<16x256xf32>
    %c1_35 = arith.constant 1 : index
    %c0_36 = arith.constant 0 : index
    %35 = vector.load %arg8[%c1_35, %c0_36] : memref<18x64xf32, #tpu.memory_space<vmem>>, vector<16x64xf32>
    %c64_37 = arith.constant 64 : index
    %c0_38 = arith.constant 0 : index
    %36 = vector.load %arg4[%c64_37, %c0_38] : memref<192x256xf32, #tpu.memory_space<vmem>>, vector<64x256xf32>
    %cst_39 = arith.constant dense<0.000000e+00> : vector<16x256xf32>
    %37 = tpu.matmul %35, %36, %cst_39 {dimension_numbers = #tpu.dot_dimension_numbers<[1], [0], [0], [1], [0, 0, 1, 1], [], []>} : vector<16x64xf32>, vector<64x256xf32>, vector<16x256xf32> -> vector<16x256xf32>
    %38 = arith.addf %34, %37 : vector<16x256xf32>
    %c2_40 = arith.constant 2 : index
    %c0_41 = arith.constant 0 : index
    %39 = vector.load %arg8[%c2_40, %c0_41] : memref<18x64xf32, #tpu.memory_space<vmem>>, vector<16x64xf32>
    %c128_42 = arith.constant 128 : index
    %c0_43 = arith.constant 0 : index
    %40 = vector.load %arg4[%c128_42, %c0_43] : memref<192x256xf32, #tpu.memory_space<vmem>>, vector<64x256xf32>
    %cst_44 = arith.constant dense<0.000000e+00> : vector<16x256xf32>
    %41 = tpu.matmul %39, %40, %cst_44 {dimension_numbers = #tpu.dot_dimension_numbers<[1], [0], [0], [1], [0, 0, 1, 1], [], []>} : vector<16x64xf32>, vector<64x256xf32>, vector<16x256xf32> -> vector<16x256xf32>
    %42 = arith.addf %38, %41 : vector<16x256xf32>
    %c0_45 = arith.constant 0 : index
    %c0_46 = arith.constant 0 : index
    %43 = vector.load %arg5[%c0_45, %c0_46] : memref<1x256xf32, #tpu.memory_space<vmem>>, vector<1x256xf32>
    %44 = vector.broadcast %43 : vector<1x256xf32> to vector<16x256xf32>
    %45 = arith.addf %42, %44 : vector<16x256xf32>
    %cst_47 = arith.constant 0.000000e+00 : f32
    %46 = vector.broadcast %cst_47 : f32 to vector<16x256xf32>
    %47 = arith.cmpf oge, %45, %46 : vector<16x256xf32>
    %cst_48 = arith.constant 0.00999999977 : f32
    %48 = vector.broadcast %cst_48 : f32 to vector<16x256xf32>
    %49 = arith.mulf %48, %45 : vector<16x256xf32>
    %50 = arith.select %47, %45, %49 : vector<16x256xi1>, vector<16x256xf32>
    %c0_49 = arith.constant 0 : index
    %c0_50 = arith.constant 0 : index
    %c0_51 = arith.constant 0 : index
    %51 = vector.load %arg6[%c0_49, %c0_50, %c0_51] : memref<1x16x256xf32, #tpu.memory_space<vmem>>, vector<1x16x256xf32>
    %52 = vector.shape_cast %51 : vector<1x16x256xf32> to vector<16x256xf32>
    %53 = vector.shape_cast %50 : vector<16x256xf32> to vector<1x16x256xf32>
    tpu.vector_store %arg6[%c0_49, %c0_50, %c0_51], %53 {strides = array<i32>} : memref<1x16x256xf32, #tpu.memory_space<vmem>>, vector<1x16x256xf32>,
    return
  }
  func.func @transform_0(%arg0: i32) -> (i32, i32, i32) {
    %c0_i32 = arith.constant 0 : i32
    %c0_i32_0 = arith.constant 0 : i32
    %c0_i32_1 = arith.constant 0 : i32
    return %arg0, %c0_i32, %c0_i32_0 : i32, i32, i32
  }
  func.func @transform_1(%arg0: i32) -> (i32, i32) {
    %c0_i32 = arith.constant 0 : i32
    %c0_i32_0 = arith.constant 0 : i32
    %c0_i32_1 = arith.constant 0 : i32
    return %c0_i32, %c0_i32_0 : i32, i32
  }
  func.func @transform_2(%arg0: i32) -> (i32, i32) {
    %c0_i32 = arith.constant 0 : i32
    %c0_i32_0 = arith.constant 0 : i32
    %c0_i32_1 = arith.constant 0 : i32
    return %c0_i32, %c0_i32_0 : i32, i32
  }
  func.func @transform_3(%arg0: i32) -> (i32, i32) {
    %c0_i32 = arith.constant 0 : i32
    %c0_i32_0 = arith.constant 0 : i32
    %c0_i32_1 = arith.constant 0 : i32
    return %c0_i32, %c0_i32_0 : i32, i32
  }
  func.func @transform_4(%arg0: i32) -> (i32, i32) {
    %c0_i32 = arith.constant 0 : i32
    %c0_i32_0 = arith.constant 0 : i32
    %c0_i32_1 = arith.constant 0 : i32
    return %c0_i32, %c0_i32_0 : i32, i32
  }
  func.func @transform_5(%arg0: i32) -> (i32, i32, i32) {
    %c0_i32 = arith.constant 0 : i32
    %c0_i32_0 = arith.constant 0 : i32
    %c0_i32_1 = arith.constant 0 : i32
    return %arg0, %c0_i32, %c0_i32_0 : i32, i32, i32
  }
}

</mosaic_0001>

<llo_original>
// kernel: tpu_custom_call.1
$region0: #{tpu_custom_call.1}
  #allocation0 [shape = 'u32[]', space=smem, size = 0x4, offset = 0x4, fixed_abs, tag = 'smem constant byte address 0x4 - core index']
  #allocation1 [shape = 'u32[144,128]{1,0:T(1,128)}', space=vmem, size = 0x12000, scoped, tag = 'internal scratch']
  #allocation2 [shape = 'f32[18,64]{1,0:T(8,128)}', space=vmem, size = 0x3000, scoped, tag = 'scratch operand']
  #allocation3 [shape = 'f32[18,64]{1,0:T(8,128)}', space=vmem, size = 0x3000, scoped, tag = 'scratch operand']
  %s0 = inlined_call_operand.vmem [shape: f32[2,16,64], index: 0, kind: input, shape index: {}]
  %s1 = inlined_call_operand.vmem [shape: f32[192,64], index: 1, kind: input, shape index: {}]
  %s2 = inlined_call_operand.vmem [shape: f32[1,64], index: 2, kind: input, shape index: {}]
  %s3 = inlined_call_operand.hbm [shape: f32[192,256], index: 3, kind: input, shape index: {}]
  %s4 = inlined_call_operand.vmem [shape: f32[1,256], index: 4, kind: input, shape index: {}]
  %s5 = inlined_call_operand.hbm [shape: f32[2,16,256], index: 5, kind: output, shape index: {}]
  %s6 = sld [smem:[#allocation0]]
  $region57: #{tpu_custom_call.1} parent=0
    _
  %s8 = ssub.s32 1, %s6
  %s9 = scalar_select 0, %s8, %s6
  $region1: #{tpu_custom_call.1} parent=0
    #allocation4 [shape = 'u8[196608]{0}', space=vmem, size = 0x30000, scoped, tag = 'input window, operand 3, single buffered']
    #allocation5 [shape = 's32[2]{0}', space=sflag, size = 0x8, scoped, tag = 'scoped memory for tpu_custom_call.1']
    #allocation6 [shape = 's32[2]{0}', space=sflag, size = 0x8, scoped, tag = 'scoped memory for tpu_custom_call.1']
    #allocation7 [shape = 'u8[32768]{0}', space=vmem, size = 0x8000, scoped, tag = 'output window, operand 0']
    %10 = vsyncpa [#allocation5], 0
    %11 = vsyncpa [#allocation6], 0
    %s12 = scalar_lea.sflag [#allocation6], 1
    %13 = vsyncpa %s12, 0
    loop: start=0, step=1, limit=4
    $region2: #{tpu_custom_call.1} parent=1 // loop_pre_header
      _
    $region3: #{tpu_custom_call.1} parent=1 // loop_header
      %s15 = sphi 0, %s19
      %p16 = scmp.ge.s32.totalorder %s15, 4
      %s25 = sphi 0, %s27
      %s28 = sphi 0, %s25
      %s29 = sphi 0, %s28
      %s45 = sphi 0, %s29
      %s49 = sphi 0, %s49
      %s51 = sphi 0, %s49
      %s52 = sphi 0, %s51
      %s66 = sphi 0, %s52
      %s70 = sphi 0, %s70
      %s72 = sphi 0, %s70
      %s73 = sphi 0, %s72
      %s87 = sphi 0, %s73
      %s91 = sphi 0, %s91
      %s93 = sphi 0, %s91
      %s94 = sphi 0, %s93
      %s108 = sphi 0, %s94
      %s112 = sphi 0, %s112
      %s114 = sphi 0, %s112
      %s115 = sphi 0, %s114
      %s129 = sphi 0, %s115
      %s135 = sphi 0, %s137
      %s138 = sphi 0, %s135
      %s139 = sphi 0, %s138
      %s155 = sphi 0, %s139
    $region4: #{tpu_custom_call.1} parent=1 // loop_header_branch
      %18 = sbr.rel (%p16) target = $region8
    $region5: #{tpu_custom_call.1} parent=1 // loop_body
      %s20 = ssub.s32 %s15, 1
      %s21 = ssub.s32 %s15, 2
      %s22 = sadd.s32 %s15, 1
      %s23 = ssub.s32 %s15, %s22
      %p24 = scmp.eq.s32.totalorder %s23, 0
      %s26 = sadd.s32 %s25, 1
      %s27 = scalar_select %p24, %s25, %s26
      %p30 = pneg %p24
      %p31 = scmp.eq.s32.totalorder %s15, 1
      %p32 = por %p30, %p31
      %p33 = scmp.ne.s32.totalorder %s25, %s28
      %p34 = scmp.eq.s32.totalorder %s15, 0
      %p35 = por %p33, %p34
      %p36 = scmp.ne.s32.totalorder %s25, %s28
      %p37 = scmp.eq.s32.totalorder %s20, 1
      %p38 = por %p36, %p37
      %p39 = scmp.ne.s32.totalorder %s28, %s29
      %p40 = scmp.eq.s32.totalorder %s20, 0
      %p41 = por %p39, %p40
      %p42 = scmp.ne.s32.totalorder %s28, %s29
      %p43 = scmp.eq.s32.totalorder %s21, 1
      %p44 = por %p42, %p43
      %p46 = scmp.ne.s32.totalorder %s29, %s45
      %p47 = scmp.eq.s32.totalorder %s21, 0
      %p48 = por %p46, %p47
      %s50 = sadd.s32 %s49, 1
      %p53 = scmp.eq.s32.totalorder %s15, 1
      %p54 = scmp.ne.s32.totalorder %s49, %s51
      %p55 = scmp.eq.s32.totalorder %s15, 0
      %p56 = por %p54, %p55
      %p57 = scmp.ne.s32.totalorder %s49, %s51
      %p58 = scmp.eq.s32.totalorder %s20, 1
      %p59 = por %p57, %p58
      %p60 = scmp.ne.s32.totalorder %s51, %s52
      %p61 = scmp.eq.s32.totalorder %s20, 0
      %p62 = por %p60, %p61
      %p63 = scmp.ne.s32.totalorder %s51, %s52
      %p64 = scmp.eq.s32.totalorder %s21, 1
      %p65 = por %p63, %p64
      %p67 = scmp.ne.s32.totalorder %s52, %s66
      %p68 = scmp.eq.s32.totalorder %s21, 0
      %p69 = por %p67, %p68
      %s71 = sadd.s32 %s70, 1
      %p74 = scmp.eq.s32.totalorder %s15, 1
      %p75 = scmp.ne.s32.totalorder %s70, %s72
      %p76 = scmp.eq.s32.totalorder %s15, 0
      %p77 = por %p75, %p76
      %p78 = scmp.ne.s32.totalorder %s70, %s72
      %p79 = scmp.eq.s32.totalorder %s20, 1
      %p80 = por %p78, %p79
      %p81 = scmp.ne.s32.totalorder %s72, %s73
      %p82 = scmp.eq.s32.totalorder %s20, 0
      %p83 = por %p81, %p82
      %p84 = scmp.ne.s32.totalorder %s72, %s73
      %p85 = scmp.eq.s32.totalorder %s21, 1
      %p86 = por %p84, %p85
      %p88 = scmp.ne.s32.totalorder %s73, %s87
      %p89 = scmp.eq.s32.totalorder %s21, 0
      %p90 = por %p88, %p89
      %s92 = sadd.s32 %s91, 1
      %p95 = scmp.eq.s32.totalorder %s15, 1
      %p96 = scmp.ne.s32.totalorder %s91, %s93
      %p97 = scmp.eq.s32.totalorder %s15, 0
      %p98 = por %p96, %p97
      %p99 = scmp.ne.s32.totalorder %s91, %s93
      %p100 = scmp.eq.s32.totalorder %s20, 1
      %p101 = por %p99, %p100
      %p102 = scmp.ne.s32.totalorder %s93, %s94
      %p103 = scmp.eq.s32.totalorder %s20, 0
      %p104 = por %p102, %p103
      %p105 = scmp.ne.s32.totalorder %s93, %s94
      %p106 = scmp.eq.s32.totalorder %s21, 1
      %p107 = por %p105, %p106
      %p109 = scmp.ne.s32.totalorder %s94, %s108
      %p110 = scmp.eq.s32.totalorder %s21, 0
      %p111 = por %p109, %p110
      %s113 = sadd.s32 %s112, 1
      %p116 = scmp.eq.s32.totalorder %s15, 1
      %p117 = scmp.ne.s32.totalorder %s112, %s114
      %p118 = scmp.eq.s32.totalorder %s15, 0
      %p119 = por %p117, %p118
      %p120 = scmp.ne.s32.totalorder %s112, %s114
      %p121 = scmp.eq.s32.totalorder %s20, 1
      %p122 = por %p120, %p121
      %p123 = scmp.ne.s32.totalorder %s114, %s115
      %p124 = scmp.eq.s32.totalorder %s20, 0
      %p125 = por %p123, %p124
      %p126 = scmp.ne.s32.totalorder %s114, %s115
      %p127 = scmp.eq.s32.totalorder %s21, 1
      %p128 = por %p126, %p127
      %p130 = scmp.ne.s32.totalorder %s115, %s129
      %p131 = scmp.eq.s32.totalorder %s21, 0
      %p132 = por %p130, %p131
      %s133 = ssub.s32 %s15, %s22
      %p134 = scmp.eq.s32.totalorder %s133, 0
      %s136 = sadd.s32 %s135, 1
      %s137 = scalar_select %p134, %s135, %s136
      %p140 = pneg %p134
      %p141 = scmp.eq.s32.totalorder %s15, 1
      %p142 = por %p140, %p141
      %p143 = scmp.ne.s32.totalorder %s135, %s138
      %p144 = scmp.eq.s32.totalorder %s15, 0
      %p145 = por %p143, %p144
      %p146 = scmp.ne.s32.totalorder %s135, %s138
      %p147 = scmp.eq.s32.totalorder %s20, 1
      %p148 = por %p146, %p147
      %p149 = scmp.ne.s32.totalorder %s138, %s139
      %p150 = scmp.eq.s32.totalorder %s20, 0
      %p151 = por %p149, %p150
      %p152 = scmp.ne.s32.totalorder %s138, %s139
      %p153 = scmp.eq.s32.totalorder %s21, 1
      %p154 = por %p152, %p153
      %p156 = scmp.ne.s32.totalorder %s139, %s155
      %p157 = scmp.eq.s32.totalorder %s21, 0
      %p158 = por %p156, %p157
      %p159 = scmp.le.s32.totalorder 1, %s15
      %p160 = scmp.lt.s32.totalorder %s15, 3
      %p161 = pnand %p159, %p160
      %p162 = pneg %p161
      // Predicated region
      $region9: #{tpu_custom_call.1} parent=5 // pred_check
        _
      $region10: #{tpu_custom_call.1} parent=5 // pred_check_branch
        %164 = sbr.rel (%p161) target = $region12
      $region11: #{tpu_custom_call.1} parent=5 // pred_region
        %s165 = ssub.s32 %s15, 1
        // Predicated region
        $region13: #{tpu_custom_call.1} parent=11 // pred_check
          %p166 = pneg %p62
        $region14: #{tpu_custom_call.1} parent=11 // pred_check_branch
          %168 = sbr.rel (%p166) target = $region16
        $region15: #{tpu_custom_call.1} parent=11 // pred_region
          _
        $region16: #{tpu_custom_call.1} parent=11 // pred_fallthru
          _
        // Predicated region
        $region17: #{tpu_custom_call.1} parent=11 // pred_check
          %p169 = pneg %p83
        $region18: #{tpu_custom_call.1} parent=11 // pred_check_branch
          %171 = sbr.rel (%p169) target = $region20
        $region19: #{tpu_custom_call.1} parent=11 // pred_region
          _
        $region20: #{tpu_custom_call.1} parent=11 // pred_fallthru
          _
        // Predicated region
        $region21: #{tpu_custom_call.1} parent=11 // pred_check
          %p172 = pneg %p104
        $region22: #{tpu_custom_call.1} parent=11 // pred_check_branch
          %174 = sbr.rel (%p172) target = $region24
        $region23: #{tpu_custom_call.1} parent=11 // pred_region
          %s176 = ssub.s32 6144, 6144
          %177 = vsyncadd [#allocation5], %s176
          %s178 = sshll.u32 [#allocation4], 4
          %s179 = int_to_ptr.vmem [resolvable:$true] %s178
          %184 = dma.hbm_to_vmem [thread:$0]  %s3, 6144, %s179, [#allocation5], 256, 256, 16
        $region24: #{tpu_custom_call.1} parent=11 // pred_fallthru
          _
        // Predicated region
        $region25: #{tpu_custom_call.1} parent=11 // pred_check
          %p185 = pneg %p125
        $region26: #{tpu_custom_call.1} parent=11 // pred_check_branch
          %187 = sbr.rel (%p185) target = $region28
        $region27: #{tpu_custom_call.1} parent=11 // pred_region
          _
        $region28: #{tpu_custom_call.1} parent=11 // pred_fallthru
          _
      $region12: #{tpu_custom_call.1} parent=5 // pred_fallthru
        _
      %p188 = scmp.lt.s32.totalorder %s15, 2
      // Predicated region
      $region29: #{tpu_custom_call.1} parent=5 // pred_check
        %p189 = pneg %p188
      $region30: #{tpu_custom_call.1} parent=5 // pred_check_branch
        %191 = sbr.rel (%p189) target = $region32
      $region31: #{tpu_custom_call.1} parent=5 // pred_region
        // Predicated region
        $region33: #{tpu_custom_call.1} parent=31 // pred_check
          %p192 = pneg %p35
        $region34: #{tpu_custom_call.1} parent=31 // pred_check_branch
          %194 = sbr.rel (%p192) target = $region36
        $region35: #{tpu_custom_call.1} parent=31 // pred_region
          %p195 = scmp.lt.s32.totalorder %s15, 1
          %s196 = scalar_select %p195, %s15, 1
          %s197 = smul.addr %s196, 2
          %s198 = smul.addr %s197, 8
          %s199 = scalar_lea.vmem %s0, %s198
        $region36: #{tpu_custom_call.1} parent=31 // pred_fallthru
          _
      $region32: #{tpu_custom_call.1} parent=5 // pred_fallthru
        _
      %p200 = scmp.le.s32.totalorder 1, %s15
      %p201 = scmp.lt.s32.totalorder %s15, 3
      %p202 = pnand %p200, %p201
      %p203 = pneg %p202
      // Predicated region
      $region37: #{tpu_custom_call.1} parent=5 // pred_check
        _
      $region38: #{tpu_custom_call.1} parent=5 // pred_check_branch
        %205 = sbr.rel (%p202) target = $region40
      $region39: #{tpu_custom_call.1} parent=5 // pred_region
        %s206 = ssub.s32 %s15, 1
        // Predicated region
        $region41: #{tpu_custom_call.1} parent=39 // pred_check
          %p207 = pneg %p104
        $region42: #{tpu_custom_call.1} parent=39 // pred_check_branch
          %209 = sbr.rel (%p207) target = $region44
        $region43: #{tpu_custom_call.1} parent=39 // pred_region
          %210 = dma.done [#allocation5], 6144
        $region44: #{tpu_custom_call.1} parent=39 // pred_fallthru
          _
        %p211 = scmp.lt.s32.totalorder %s20, 1
        %s212 = scalar_select %p211, %s20, 1
        %s213 = smul.addr %s212, 2
        %s214 = smul.addr %s213, 8
        %s215 = scalar_lea.vmem %s0, %s214
        %p216 = pneg %p41
        %p217 = pneg %p38
        %p218 = pneg %p62
        %p219 = pneg %p59
        %p220 = pneg %p83
        %p221 = pneg %p80
        %p222 = pneg %p104
        %p223 = pneg %p101
        %p224 = pneg %p125
        %p225 = pneg %p122
        %p226 = pneg %p151
        %p227 = pneg %p148
        %s228 = sand.u32 %s138, 1
        %s229 = scalar_lea.sflag [#allocation6], %s228
        %s230 = sand.u32 %s138, 1
        %s231 = smul.addr %s230, 32
        %s232 = scalar_lea.vmem [#allocation7], %s231
        %p233 = scmp.lt.s32.totalorder %s20, 1
        %s234 = scalar_select %p233, %s20, 1
        %s235 = smul.addr %s234, 2
        %s236 = smul.addr %s235, 8
        %s237 = scalar_lea.vmem %s0, %s236
        %vm238 = vcmask 516096
        %239 = vst.msk [vmem:[#allocation2] sm:$0x1] %vm238, 0.0
        %240 = vst.msk [vmem:[#allocation2 + $0x11] sm:$0x1] %vm238, 0.0
        %241 = vst.msk [vmem:[#allocation3] sm:$0x1] %vm238, 0.0
        %242 = vst.msk [vmem:[#allocation3 + $0x11] sm:$0x1] %vm238, 0.0
        %v243 = vld [vmem:[%s237] sm:$0xff]
        %v244 = vld [vmem:[%s237 + $0x8] sm:$0xff]
        %vm245 = vcmask 523264
        %246 = vst.msk [vmem:[#allocation2 + $0x1] sm:$0xff] %vm245, %v243
        %247 = vst.msk [vmem:[#allocation2 + $0x9] sm:$0xff] %vm245, %v244
        %v248 = vld [vmem:[#allocation2] sm:$0xff]
        %v249 = vld [vmem:[#allocation2 + $0x8] sm:$0xff]
        %v250 = vld [vmem:[%s1] sm:$0xff]
        %v251 = vld [vmem:[%s1 + $0x8] sm:$0xff]
        %v252 = vld [vmem:[%s1 + $0x10] sm:$0xff]
        %v253 = vld [vmem:[%s1 + $0x18] sm:$0xff]
        %v254 = vld [vmem:[%s1 + $0x20] sm:$0xff]
        %v255 = vld [vmem:[%s1 + $0x28] sm:$0xff]
        %v256 = vld [vmem:[%s1 + $0x30] sm:$0xff]
        %v257 = vld [vmem:[%s1 + $0x38] sm:$0xff]
        %v258 = vld [vmem:[#allocation2 + $0x1] sm:$0xff]
        %v259 = vld [vmem:[#allocation2 + $0x9] sm:$0xff]
        %v260 = vld [vmem:[%s1 + $0x40] sm:$0xff]
        %v261 = vld [vmem:[%s1 + $0x48] sm:$0xff]
        %v262 = vld [vmem:[%s1 + $0x50] sm:$0xff]
        %v263 = vld [vmem:[%s1 + $0x58] sm:$0xff]
        %v264 = vld [vmem:[%s1 + $0x60] sm:$0xff]
        %v265 = vld [vmem:[%s1 + $0x68] sm:$0xff]
        %v266 = vld [vmem:[%s1 + $0x70] sm:$0xff]
        %v267 = vld [vmem:[%s1 + $0x78] sm:$0xff]
        %v269 = vsel %vm245, %v258, 0
        %v272 = vsel %vm245, %v259, 0
        %274 = vmatprep.subr.mxu0 0.0
        %275 = vmatpush1.msra.mxu0 0.0
        %276 = vmatprep.subr.mxu0 0.0
        %277 = vmatpush1.msra.mxu0 0.0
        %278 = vmatprep.subr.mxu0 0.0
        %279 = vmatpush1.msra.mxu0 0.0
        %280 = vmatprep.subr.mxu0 0.0
        %281 = vmatpush1.msra.mxu0 0.0
        %282 = vmatprep.subr.mxu0 0.0
        %283 = vmatpush1.msra.mxu0 0.0
        %284 = vmatprep.subr.mxu0 0.0
        %285 = vmatpush1.msra.mxu0 0.0
        %286 = vmatprep.subr.mxu0 0.0
        %287 = vmatpush1.msra.mxu0 0.0
        %288 = vmatprep.subr.mxu0 0.0
        %289 = vmatpush1.msra.mxu0 0.0
        %290 = vmatprep.subr.mxu0 0.0
        %291 = vmatpush1.msra.mxu0 %v267
        %292 = vmatprep.subr.mxu0 0.0
        %293 = vmatpush1.msra.mxu0 %v266
        %294 = vmatprep.subr.mxu0 0.0
        %295 = vmatpush1.msra.mxu0 %v265
        %296 = vmatprep.subr.mxu0 0.0
        %297 = vmatpush1.msra.mxu0 %v264
        %298 = vmatprep.subr.mxu0 0.0
        %299 = vmatpush1.msra.mxu0 %v263
        %300 = vmatprep.subr.mxu0 0.0
        %301 = vmatpush1.msra.mxu0 %v262
        %302 = vmatprep.subr.mxu0 0.0
        %303 = vmatpush1.msra.mxu0 %v261
        %304 = vmatprep.subr.mxu0 0.0
        %305 = vmatpush1.msra.mxu0 %v260
        %306 = vmatprep.subr.mxu0 0.0
        %307 = vmatpush2.msra.mxu0 0.0
        %308 = vmatprep.subr.mxu0 0.0
        %309 = vmatpush2.msra.mxu0 0.0
        %310 = vmatprep.subr.mxu0 0.0
        %311 = vmatpush2.msra.mxu0 0.0
        %312 = vmatprep.subr.mxu0 0.0
        %313 = vmatpush2.msra.mxu0 0.0
        %314 = vmatprep.subr.mxu0 0.0
        %315 = vmatpush2.msra.mxu0 0.0
        %316 = vmatprep.subr.mxu0 0.0
        %317 = vmatpush2.msra.mxu0 0.0
        %318 = vmatprep.subr.mxu0 0.0
        %319 = vmatpush2.msra.mxu0 0.0
        %320 = vmatprep.subr.mxu0 0.0
        %321 = vmatpush2.msra.mxu0 0.0
        %322 = vmatprep.subr.mxu0 0.0
        %323 = vmatpush2.msra.mxu0 0.0
        %324 = vmatprep.subr.mxu0 0.0
        %325 = vmatpush2.msra.mxu0 0.0
        %326 = vmatprep.subr.mxu0 0.0
        %327 = vmatpush2.msra.mxu0 0.0
        %328 = vmatprep.subr.mxu0 0.0
        %329 = vmatpush2.msra.mxu0 0.0
        %330 = vmatprep.subr.mxu0 0.0
        %331 = vmatpush2.msra.mxu0 0.0
        %332 = vmatprep.subr.mxu0 0.0
        %333 = vmatpush2.msra.mxu0 0.0
        %334 = vmatprep.subr.mxu0 0.0
        %335 = vmatpush2.msra.mxu0 0.0
        %336 = vmatprep.subr.mxu0 0.0
        %337 = vmatpush2.msra.mxu0 0.0
        %338 = vmatprep.mubr.f32.mxu0 0.0
        %339 = vmatmul.mubr.f32.gmra.mxu0 %v269
        %v340 = vpop.f32.mrf.mxu0
        %v341 = vadd.f32 0.0, %v340
        %v342 = vpop.f32.mrf.mxu0
        %343 = vmatprep.mubr.f32.mxu0 0.0
        %344 = vmatmul.mubr.f32.gmra.mxu0 %v272
        %v345 = vpop.f32.mrf.mxu0
        %v346 = vadd.f32 0.0, %v345
        %v347 = vpop.f32.mrf.mxu0
        %348 = vdwg.mxu0
        %v350 = vsel %vm245, %v248, 0
        %v353 = vsel %vm245, %v249, 0
        %355 = vmatprep.subr.mxu0 0.0
        %356 = vmatpush1.msra.mxu0 0.0
        %357 = vmatprep.subr.mxu0 0.0
        %358 = vmatpush1.msra.mxu0 0.0
        %359 = vmatprep.subr.mxu0 0.0
        %360 = vmatpush1.msra.mxu0 0.0
        %361 = vmatprep.subr.mxu0 0.0
        %362 = vmatpush1.msra.mxu0 0.0
        %363 = vmatprep.subr.mxu0 0.0
        %364 = vmatpush1.msra.mxu0 0.0
        %365 = vmatprep.subr.mxu0 0.0
        %366 = vmatpush1.msra.mxu0 0.0
        %367 = vmatprep.subr.mxu0 0.0
        %368 = vmatpush1.msra.mxu0 0.0
        %369 = vmatprep.subr.mxu0 0.0
        %370 = vmatpush1.msra.mxu0 0.0
        %371 = vmatprep.subr.mxu0 0.0
        %372 = vmatpush1.msra.mxu0 %v257
        %373 = vmatprep.subr.mxu0 0.0
        %374 = vmatpush1.msra.mxu0 %v256
        %375 = vmatprep.subr.mxu0 0.0
        %376 = vmatpush1.msra.mxu0 %v255
        %377 = vmatprep.subr.mxu0 0.0
        %378 = vmatpush1.msra.mxu0 %v254
        %379 = vmatprep.subr.mxu0 0.0
        %380 = vmatpush1.msra.mxu0 %v253
        %381 = vmatprep.subr.mxu0 0.0
        %382 = vmatpush1.msra.mxu0 %v252
        %383 = vmatprep.subr.mxu0 0.0
        %384 = vmatpush1.msra.mxu0 %v251
        %385 = vmatprep.subr.mxu0 0.0
        %386 = vmatpush1.msra.mxu0 %v250
        %387 = vmatprep.subr.mxu0 0.0
        %388 = vmatpush2.msra.mxu0 0.0
        %389 = vmatprep.subr.mxu0 0.0
        %390 = vmatpush2.msra.mxu0 0.0
        %391 = vmatprep.subr.mxu0 0.0
        %392 = vmatpush2.msra.mxu0 0.0
        %393 = vmatprep.subr.mxu0 0.0
        %394 = vmatpush2.msra.mxu0 0.0
        %395 = vmatprep.subr.mxu0 0.0
        %396 = vmatpush2.msra.mxu0 0.0
        %397 = vmatprep.subr.mxu0 0.0
        %398 = vmatpush2.msra.mxu0 0.0
        %399 = vmatprep.subr.mxu0 0.0
        %400 = vmatpush2.msra.mxu0 0.0
        %401 = vmatprep.subr.mxu0 0.0
        %402 = vmatpush2.msra.mxu0 0.0
        %403 = vmatprep.subr.mxu0 0.0
        %404 = vmatpush2.msra.mxu0 0.0
        %405 = vmatprep.subr.mxu0 0.0
        %406 = vmatpush2.msra.mxu0 0.0
        %407 = vmatprep.subr.mxu0 0.0
        %408 = vmatpush2.msra.mxu0 0.0
        %409 = vmatprep.subr.mxu0 0.0
        %410 = vmatpush2.msra.mxu0 0.0
        %411 = vmatprep.subr.mxu0 0.0
        %412 = vmatpush2.msra.mxu0 0.0
        %413 = vmatprep.subr.mxu0 0.0
        %414 = vmatpush2.msra.mxu0 0.0
        %415 = vmatprep.subr.mxu0 0.0
        %416 = vmatpush2.msra.mxu0 0.0
        %417 = vmatprep.subr.mxu0 0.0
        %418 = vmatpush2.msra.mxu0 0.0
        %419 = vmatprep.mubr.f32.mxu0 0.0
        %420 = vmatmul.mubr.f32.gmra.mxu0 %v350
        %v421 = vpop.f32.mrf.mxu0
        %v422 = vadd.f32 %v341, %v421
        %v423 = vpop.f32.mrf.mxu0
        %424 = vmatprep.mubr.f32.mxu0 0.0
        %425 = vmatmul.mubr.f32.gmra.mxu0 %v353
        %v426 = vpop.f32.mrf.mxu0
        %v427 = vadd.f32 %v346, %v426
        %v428 = vpop.f32.mrf.mxu0
        %429 = vdwg.mxu0
        %v430 = vld [vmem:[#allocation2 + $0x2] sm:$0xff]
        %v431 = vld [vmem:[#allocation2 + $0xa] sm:$0xff]
        %v432 = vld [vmem:[%s1 + $0x80] sm:$0xff]
        %v433 = vld [vmem:[%s1 + $0x88] sm:$0xff]
        %v434 = vld [vmem:[%s1 + $0x90] sm:$0xff]
        %v435 = vld [vmem:[%s1 + $0x98] sm:$0xff]
        %v436 = vld [vmem:[%s1 + $0xa0] sm:$0xff]
        %v437 = vld [vmem:[%s1 + $0xa8] sm:$0xff]
        %v438 = vld [vmem:[%s1 + $0xb0] sm:$0xff]
        %v439 = vld [vmem:[%s1 + $0xb8] sm:$0xff]
        %v441 = vsel %vm245, %v430, 0
        %v444 = vsel %vm245, %v431, 0
        %446 = vmatprep.subr.mxu0 0.0
        %447 = vmatpush1.msra.mxu0 0.0
        %448 = vmatprep.subr.mxu0 0.0
        %449 = vmatpush1.msra.mxu0 0.0
        %450 = vmatprep.subr.mxu0 0.0
        %451 = vmatpush1.msra.mxu0 0.0
        %452 = vmatprep.subr.mxu0 0.0
        %453 = vmatpush1.msra.mxu0 0.0
        %454 = vmatprep.subr.mxu0 0.0
        %455 = vmatpush1.msra.mxu0 0.0
        %456 = vmatprep.subr.mxu0 0.0
        %457 = vmatpush1.msra.mxu0 0.0
        %458 = vmatprep.subr.mxu0 0.0
        %459 = vmatpush1.msra.mxu0 0.0
        %460 = vmatprep.subr.mxu0 0.0
        %461 = vmatpush1.msra.mxu0 0.0
        %462 = vmatprep.subr.mxu0 0.0
        %463 = vmatpush1.msra.mxu0 %v439
        %464 = vmatprep.subr.mxu0 0.0
        %465 = vmatpush1.msra.mxu0 %v438
        %466 = vmatprep.subr.mxu0 0.0
        %467 = vmatpush1.msra.mxu0 %v437
        %468 = vmatprep.subr.mxu0 0.0
        %469 = vmatpush1.msra.mxu0 %v436
        %470 = vmatprep.subr.mxu0 0.0
        %471 = vmatpush1.msra.mxu0 %v435
        %472 = vmatprep.subr.mxu0 0.0
        %473 = vmatpush1.msra.mxu0 %v434
        %474 = vmatprep.subr.mxu0 0.0
        %475 = vmatpush1.msra.mxu0 %v433
        %476 = vmatprep.subr.mxu0 0.0
        %477 = vmatpush1.msra.mxu0 %v432
        %478 = vmatprep.subr.mxu0 0.0
        %479 = vmatpush2.msra.mxu0 0.0
        %480 = vmatprep.subr.mxu0 0.0
        %481 = vmatpush2.msra.mxu0 0.0
        %482 = vmatprep.subr.mxu0 0.0
        %483 = vmatpush2.msra.mxu0 0.0
        %484 = vmatprep.subr.mxu0 0.0
        %485 = vmatpush2.msra.mxu0 0.0
        %486 = vmatprep.subr.mxu0 0.0
        %487 = vmatpush2.msra.mxu0 0.0
        %488 = vmatprep.subr.mxu0 0.0
        %489 = vmatpush2.msra.mxu0 0.0
        %490 = vmatprep.subr.mxu0 0.0
        %491 = vmatpush2.msra.mxu0 0.0
        %492 = vmatprep.subr.mxu0 0.0
        %493 = vmatpush2.msra.mxu0 0.0
        %494 = vmatprep.subr.mxu0 0.0
        %495 = vmatpush2.msra.mxu0 0.0
        %496 = vmatprep.subr.mxu0 0.0
        %497 = vmatpush2.msra.mxu0 0.0
        %498 = vmatprep.subr.mxu0 0.0
        %499 = vmatpush2.msra.mxu0 0.0
        %500 = vmatprep.subr.mxu0 0.0
        %501 = vmatpush2.msra.mxu0 0.0
        %502 = vmatprep.subr.mxu0 0.0
        %503 = vmatpush2.msra.mxu0 0.0
        %504 = vmatprep.subr.mxu0 0.0
        %505 = vmatpush2.msra.mxu0 0.0
        %506 = vmatprep.subr.mxu0 0.0
        %507 = vmatpush2.msra.mxu0 0.0
        %508 = vmatprep.subr.mxu0 0.0
        %509 = vmatpush2.msra.mxu0 0.0
        %510 = vmatprep.mubr.f32.mxu0 0.0
        %511 = vmatmul.mubr.f32.gmra.mxu0 %v441
        %v512 = vpop.f32.mrf.mxu0
        %v513 = vadd.f32 0.0, %v512
        %v514 = vpop.f32.mrf.mxu0
        %515 = vmatprep.mubr.f32.mxu0 0.0
        %516 = vmatmul.mubr.f32.gmra.mxu0 %v444
        %v517 = vpop.f32.mrf.mxu0
        %v518 = vadd.f32 0.0, %v517
        %v519 = vpop.f32.mrf.mxu0
        %520 = vdwg.mxu0
        %v521 = vadd.f32 %v422, %v513
        %v522 = vadd.f32 %v427, %v518
        %v523 = vld [vmem:[%s2] sm:$0x1]
        %v525 = vlaneseq
        %v526 = vshrl.u32 %v525, 7
        %v527 = vsub.s32 0, %v526
        %v528 = vrot.slane %v523, %v527
        %v530 = vadd.f32 %v521, %v528
        %v531 = vadd.f32 %v522, %v528
        %vm532 = vcmp.ge.f32.partialorder %v530, 0.0
        %vm533 = vcmp.ge.f32.partialorder %v531, 0.0
        %v534 = vmul.f32 %v530, 0.01
        %v535 = vmul.f32 %v531, 0.01
        %v536 = vsel %vm532, %v530, %v534
        %v537 = vsel %vm533, %v531, %v535
        %538 = vst.msk [vmem:[#allocation3 + $0x1] sm:$0xff] %vm245, %v536
        %539 = vst.msk [vmem:[#allocation3 + $0x9] sm:$0xff] %vm245, %v537
        %v540 = vld [vmem:[#allocation3] sm:$0xff]
        %v541 = vld [vmem:[#allocation3 + $0x8] sm:$0xff]
        %v542 = vld [vmem:[#allocation4] sm:$0xff]
        %v543 = vld [vmem:[#allocation4 + $0x8] sm:$0xff]
        %v544 = vld [vmem:[#allocation4 + $0x10] sm:$0xff]
        %v545 = vld [vmem:[#allocation4 + $0x18] sm:$0xff]
        %v546 = vld [vmem:[#allocation4 + $0x20] sm:$0xff]
        %v547 = vld [vmem:[#allocation4 + $0x28] sm:$0xff]
        %v548 = vld [vmem:[#allocation4 + $0x30] sm:$0xff]
        %v549 = vld [vmem:[#allocation4 + $0x38] sm:$0xff]
        %v550 = vld [vmem:[#allocation4 + $0x40] sm:$0xff]
        %v551 = vld [vmem:[#allocation4 + $0x48] sm:$0xff]
        %v552 = vld [vmem:[#allocation4 + $0x50] sm:$0xff]
        %v553 = vld [vmem:[#allocation4 + $0x58] sm:$0xff]
        %v554 = vld [vmem:[#allocation4 + $0x60] sm:$0xff]
        %v555 = vld [vmem:[#allocation4 + $0x68] sm:$0xff]
        %v556 = vld [vmem:[#allocation4 + $0x70] sm:$0xff]
        %v557 = vld [vmem:[#allocation4 + $0x78] sm:$0xff]
        %v558 = vld [vmem:[#allocation3 + $0x1] sm:$0xff]
        %v559 = vld [vmem:[#allocation3 + $0x9] sm:$0xff]
        %v560 = vld [vmem:[#allocation4 + $0x80] sm:$0xff]
        %v561 = vld [vmem:[#allocation4 + $0x88] sm:$0xff]
        %v562 = vld [vmem:[#allocation4 + $0x90] sm:$0xff]
        %v563 = vld [vmem:[#allocation4 + $0x98] sm:$0xff]
        %v564 = vld [vmem:[#allocation4 + $0xa0] sm:$0xff]
        %v565 = vld [vmem:[#allocation4 + $0xa8] sm:$0xff]
        %v566 = vld [vmem:[#allocation4 + $0xb0] sm:$0xff]
        %v567 = vld [vmem:[#allocation4 + $0xb8] sm:$0xff]
        %v568 = vld [vmem:[#allocation4 + $0xc0] sm:$0xff]
        %v569 = vld [vmem:[#allocation4 + $0xc8] sm:$0xff]
        %v570 = vld [vmem:[#allocation4 + $0xd0] sm:$0xff]
        %v571 = vld [vmem:[#allocation4 + $0xd8] sm:$0xff]
        %v572 = vld [vmem:[#allocation4 + $0xe0] sm:$0xff]
        %v573 = vld [vmem:[#allocation4 + $0xe8] sm:$0xff]
        %v574 = vld [vmem:[#allocation4 + $0xf0] sm:$0xff]
        %v575 = vld [vmem:[#allocation4 + $0xf8] sm:$0xff]
        %v577 = vsel %vm245, %v558, 0
        %v580 = vsel %vm245, %v559, 0
        %582 = vmatprep.subr.mxu0 0.0
        %583 = vmatpush1.msra.mxu0 0.0
        %584 = vmatprep.subr.mxu0 0.0
        %585 = vmatpush1.msra.mxu0 0.0
        %586 = vmatprep.subr.mxu0 0.0
        %587 = vmatpush1.msra.mxu0 0.0
        %588 = vmatprep.subr.mxu0 0.0
        %589 = vmatpush1.msra.mxu0 0.0
        %590 = vmatprep.subr.mxu0 0.0
        %591 = vmatpush1.msra.mxu0 0.0
        %592 = vmatprep.subr.mxu0 0.0
        %593 = vmatpush1.msra.mxu0 0.0
        %594 = vmatprep.subr.mxu0 0.0
        %595 = vmatpush1.msra.mxu0 0.0
        %596 = vmatprep.subr.mxu0 0.0
        %597 = vmatpush1.msra.mxu0 0.0
        %598 = vmatprep.subr.mxu0 %v575
        %599 = vmatpush1.msra.mxu0 %v574
        %600 = vmatprep.subr.mxu0 %v573
        %601 = vmatpush1.msra.mxu0 %v572
        %602 = vmatprep.subr.mxu0 %v571
        %603 = vmatpush1.msra.mxu0 %v570
        %604 = vmatprep.subr.mxu0 %v569
        %605 = vmatpush1.msra.mxu0 %v568
        %606 = vmatprep.subr.mxu0 %v567
        %607 = vmatpush1.msra.mxu0 %v566
        %608 = vmatprep.subr.mxu0 %v565
        %609 = vmatpush1.msra.mxu0 %v564
        %610 = vmatprep.subr.mxu0 %v563
        %611 = vmatpush1.msra.mxu0 %v562
        %612 = vmatprep.subr.mxu0 %v561
        %613 = vmatpush1.msra.mxu0 %v560
        %614 = vmatprep.subr.mxu0 0.0
        %615 = vmatpush2.msra.mxu0 0.0
        %616 = vmatprep.subr.mxu0 0.0
        %617 = vmatpush2.msra.mxu0 0.0
        %618 = vmatprep.subr.mxu0 0.0
        %619 = vmatpush2.msra.mxu0 0.0
        %620 = vmatprep.subr.mxu0 0.0
        %621 = vmatpush2.msra.mxu0 0.0
        %622 = vmatprep.subr.mxu0 0.0
        %623 = vmatpush2.msra.mxu0 0.0
        %624 = vmatprep.subr.mxu0 0.0
        %625 = vmatpush2.msra.mxu0 0.0
        %626 = vmatprep.subr.mxu0 0.0
        %627 = vmatpush2.msra.mxu0 0.0
        %628 = vmatprep.subr.mxu0 0.0
        %629 = vmatpush2.msra.mxu0 0.0
        %630 = vmatprep.subr.mxu0 0.0
        %631 = vmatpush2.msra.mxu0 0.0
        %632 = vmatprep.subr.mxu0 0.0
        %633 = vmatpush2.msra.mxu0 0.0
        %634 = vmatprep.subr.mxu0 0.0
        %635 = vmatpush2.msra.mxu0 0.0
        %636 = vmatprep.subr.mxu0 0.0
        %637 = vmatpush2.msra.mxu0 0.0
        %638 = vmatprep.subr.mxu0 0.0
        %639 = vmatpush2.msra.mxu0 0.0
        %640 = vmatprep.subr.mxu0 0.0
        %641 = vmatpush2.msra.mxu0 0.0
        %642 = vmatprep.subr.mxu0 0.0
        %643 = vmatpush2.msra.mxu0 0.0
        %644 = vmatprep.subr.mxu0 0.0
        %645 = vmatpush2.msra.mxu0 0.0
        %646 = vmatprep.mubr.f32.mxu0 0.0
        %647 = vmatmul.mubr.f32.gmra.mxu0 %v577
        %v648 = vpop.f32.mrf.mxu0
        %v649 = vadd.f32 0.0, %v648
        %v650 = vpop.f32.mrf.mxu0
        %v651 = vadd.f32 0.0, %v650
        %652 = vmatprep.mubr.f32.mxu0 0.0
        %653 = vmatmul.mubr.f32.gmra.mxu0 %v580
        %v654 = vpop.f32.mrf.mxu0
        %v655 = vadd.f32 0.0, %v654
        %v656 = vpop.f32.mrf.mxu0
        %v657 = vadd.f32 0.0, %v656
        %658 = vdwg.mxu0
        %v660 = vsel %vm245, %v540, 0
        %v663 = vsel %vm245, %v541, 0
        %665 = vmatprep.subr.mxu0 0.0
        %666 = vmatpush1.msra.mxu0 0.0
        %667 = vmatprep.subr.mxu0 0.0
        %668 = vmatpush1.msra.mxu0 0.0
        %669 = vmatprep.subr.mxu0 0.0
        %670 = vmatpush1.msra.mxu0 0.0
        %671 = vmatprep.subr.mxu0 0.0
        %672 = vmatpush1.msra.mxu0 0.0
        %673 = vmatprep.subr.mxu0 0.0
        %674 = vmatpush1.msra.mxu0 0.0
        %675 = vmatprep.subr.mxu0 0.0
        %676 = vmatpush1.msra.mxu0 0.0
        %677 = vmatprep.subr.mxu0 0.0
        %678 = vmatpush1.msra.mxu0 0.0
        %679 = vmatprep.subr.mxu0 0.0
        %680 = vmatpush1.msra.mxu0 0.0
        %681 = vmatprep.subr.mxu0 %v557
        %682 = vmatpush1.msra.mxu0 %v556
        %683 = vmatprep.subr.mxu0 %v555
        %684 = vmatpush1.msra.mxu0 %v554
        %685 = vmatprep.subr.mxu0 %v553
        %686 = vmatpush1.msra.mxu0 %v552
        %687 = vmatprep.subr.mxu0 %v551
        %688 = vmatpush1.msra.mxu0 %v550
        %689 = vmatprep.subr.mxu0 %v549
        %690 = vmatpush1.msra.mxu0 %v548
        %691 = vmatprep.subr.mxu0 %v547
        %692 = vmatpush1.msra.mxu0 %v546
        %693 = vmatprep.subr.mxu0 %v545
        %694 = vmatpush1.msra.mxu0 %v544
        %695 = vmatprep.subr.mxu0 %v543
        %696 = vmatpush1.msra.mxu0 %v542
        %697 = vmatprep.subr.mxu0 0.0
        %698 = vmatpush2.msra.mxu0 0.0
        %699 = vmatprep.subr.mxu0 0.0
        %700 = vmatpush2.msra.mxu0 0.0
        %701 = vmatprep.subr.mxu0 0.0
        %702 = vmatpush2.msra.mxu0 0.0
        %703 = vmatprep.subr.mxu0 0.0
        %704 = vmatpush2.msra.mxu0 0.0
        %705 = vmatprep.subr.mxu0 0.0
        %706 = vmatpush2.msra.mxu0 0.0
        %707 = vmatprep.subr.mxu0 0.0
        %708 = vmatpush2.msra.mxu0 0.0
        %709 = vmatprep.subr.mxu0 0.0
        %710 = vmatpush2.msra.mxu0 0.0
        %711 = vmatprep.subr.mxu0 0.0
        %712 = vmatpush2.msra.mxu0 0.0
        %713 = vmatprep.subr.mxu0 0.0
        %714 = vmatpush2.msra.mxu0 0.0
        %715 = vmatprep.subr.mxu0 0.0
        %716 = vmatpush2.msra.mxu0 0.0
        %717 = vmatprep.subr.mxu0 0.0
        %718 = vmatpush2.msra.mxu0 0.0
        %719 = vmatprep.subr.mxu0 0.0
        %720 = vmatpush2.msra.mxu0 0.0
        %721 = vmatprep.subr.mxu0 0.0
        %722 = vmatpush2.msra.mxu0 0.0
        %723 = vmatprep.subr.mxu0 0.0
        %724 = vmatpush2.msra.mxu0 0.0
        %725 = vmatprep.subr.mxu0 0.0
        %726 = vmatpush2.msra.mxu0 0.0
        %727 = vmatprep.subr.mxu0 0.0
        %728 = vmatpush2.msra.mxu0 0.0
        %729 = vmatprep.mubr.f32.mxu0 0.0
        %730 = vmatmul.mubr.f32.gmra.mxu0 %v660
        %v731 = vpop.f32.mrf.mxu0
        %v732 = vadd.f32 %v649, %v731
        %v733 = vpop.f32.mrf.mxu0
        %v734 = vadd.f32 %v651, %v733
        %735 = vmatprep.mubr.f32.mxu0 0.0
        %736 = vmatmul.mubr.f32.gmra.mxu0 %v663
        %v737 = vpop.f32.mrf.mxu0
        %v738 = vadd.f32 %v655, %v737
        %v739 = vpop.f32.mrf.mxu0
        %v740 = vadd.f32 %v657, %v739
        %741 = vdwg.mxu0
        %v742 = vld [vmem:[#allocation3 + $0x2] sm:$0xff]
        %v743 = vld [vmem:[#allocation3 + $0xa] sm:$0xff]
        %v744 = vld [vmem:[#allocation4 + $0x100] sm:$0xff]
        %v745 = vld [vmem:[#allocation4 + $0x108] sm:$0xff]
        %v746 = vld [vmem:[#allocation4 + $0x110] sm:$0xff]
        %v747 = vld [vmem:[#allocation4 + $0x118] sm:$0xff]
        %v748 = vld [vmem:[#allocation4 + $0x120] sm:$0xff]
        %v749 = vld [vmem:[#allocation4 + $0x128] sm:$0xff]
        %v750 = vld [vmem:[#allocation4 + $0x130] sm:$0xff]
        %v751 = vld [vmem:[#allocation4 + $0x138] sm:$0xff]
        %v752 = vld [vmem:[#allocation4 + $0x140] sm:$0xff]
        %v753 = vld [vmem:[#allocation4 + $0x148] sm:$0xff]
        %v754 = vld [vmem:[#allocation4 + $0x150] sm:$0xff]
        %v755 = vld [vmem:[#allocation4 + $0x158] sm:$0xff]
        %v756 = vld [vmem:[#allocation4 + $0x160] sm:$0xff]
        %v757 = vld [vmem:[#allocation4 + $0x168] sm:$0xff]
        %v758 = vld [vmem:[#allocation4 + $0x170] sm:$0xff]
        %v759 = vld [vmem:[#allocation4 + $0x178] sm:$0xff]
        %v761 = vsel %vm245, %v742, 0
        %v764 = vsel %vm245, %v743, 0
        %766 = vmatprep.subr.mxu0 0.0
        %767 = vmatpush1.msra.mxu0 0.0
        %768 = vmatprep.subr.mxu0 0.0
        %769 = vmatpush1.msra.mxu0 0.0
        %770 = vmatprep.subr.mxu0 0.0
        %771 = vmatpush1.msra.mxu0 0.0
        %772 = vmatprep.subr.mxu0 0.0
        %773 = vmatpush1.msra.mxu0 0.0
        %774 = vmatprep.subr.mxu0 0.0
        %775 = vmatpush1.msra.mxu0 0.0
        %776 = vmatprep.subr.mxu0 0.0
        %777 = vmatpush1.msra.mxu0 0.0
        %778 = vmatprep.subr.mxu0 0.0
        %779 = vmatpush1.msra.mxu0 0.0
        %780 = vmatprep.subr.mxu0 0.0
        %781 = vmatpush1.msra.mxu0 0.0
        %782 = vmatprep.subr.mxu0 %v759
        %783 = vmatpush1.msra.mxu0 %v758
        %784 = vmatprep.subr.mxu0 %v757
        %785 = vmatpush1.msra.mxu0 %v756
        %786 = vmatprep.subr.mxu0 %v755
        %787 = vmatpush1.msra.mxu0 %v754
        %788 = vmatprep.subr.mxu0 %v753
        %789 = vmatpush1.msra.mxu0 %v752
        %790 = vmatprep.subr.mxu0 %v751
        %791 = vmatpush1.msra.mxu0 %v750
        %792 = vmatprep.subr.mxu0 %v749
        %793 = vmatpush1.msra.mxu0 %v748
        %794 = vmatprep.subr.mxu0 %v747
        %795 = vmatpush1.msra.mxu0 %v746
        %796 = vmatprep.subr.mxu0 %v745
        %797 = vmatpush1.msra.mxu0 %v744
        %798 = vmatprep.subr.mxu0 0.0
        %799 = vmatpush2.msra.mxu0 0.0
        %800 = vmatprep.subr.mxu0 0.0
        %801 = vmatpush2.msra.mxu0 0.0
        %802 = vmatprep.subr.mxu0 0.0
        %803 = vmatpush2.msra.mxu0 0.0
        %804 = vmatprep.subr.mxu0 0.0
        %805 = vmatpush2.msra.mxu0 0.0
        %806 = vmatprep.subr.mxu0 0.0
        %807 = vmatpush2.msra.mxu0 0.0
        %808 = vmatprep.subr.mxu0 0.0
        %809 = vmatpush2.msra.mxu0 0.0
        %810 = vmatprep.subr.mxu0 0.0
        %811 = vmatpush2.msra.mxu0 0.0
        %812 = vmatprep.subr.mxu0 0.0
        %813 = vmatpush2.msra.mxu0 0.0
        %814 = vmatprep.subr.mxu0 0.0
        %815 = vmatpush2.msra.mxu0 0.0
        %816 = vmatprep.subr.mxu0 0.0
        %817 = vmatpush2.msra.mxu0 0.0
        %818 = vmatprep.subr.mxu0 0.0
        %819 = vmatpush2.msra.mxu0 0.0
        %820 = vmatprep.subr.mxu0 0.0
        %821 = vmatpush2.msra.mxu0 0.0
        %822 = vmatprep.subr.mxu0 0.0
        %823 = vmatpush2.msra.mxu0 0.0
        %824 = vmatprep.subr.mxu0 0.0
        %825 = vmatpush2.msra.mxu0 0.0
        %826 = vmatprep.subr.mxu0 0.0
        %827 = vmatpush2.msra.mxu0 0.0
        %828 = vmatprep.subr.mxu0 0.0
        %829 = vmatpush2.msra.mxu0 0.0
        %830 = vmatprep.mubr.f32.mxu0 0.0
        %831 = vmatmul.mubr.f32.gmra.mxu0 %v761
        %v832 = vpop.f32.mrf.mxu0
        %v833 = vadd.f32 0.0, %v832
        %v834 = vpop.f32.mrf.mxu0
        %v835 = vadd.f32 0.0, %v834
        %836 = vmatprep.mubr.f32.mxu0 0.0
        %837 = vmatmul.mubr.f32.gmra.mxu0 %v764
        %v838 = vpop.f32.mrf.mxu0
        %v839 = vadd.f32 0.0, %v838
        %v840 = vpop.f32.mrf.mxu0
        %v841 = vadd.f32 0.0, %v840
        %842 = vdwg.mxu0
        %v843 = vadd.f32 %v732, %v833
        %v844 = vadd.f32 %v734, %v835
        %v845 = vadd.f32 %v738, %v839
        %v846 = vadd.f32 %v740, %v841
        %v847 = vld [vmem:[%s4] sm:$0x3]
        %v849 = vlaneseq
        %v850 = vshrl.u32 %v849, 7
        %v851 = vsub.s32 0, %v850
        %v852 = vrot.slane %v847, %v851
        %v853 = vlaneseq
        %v854 = vshrl.u32 %v853, 7
        %v855 = vsub.s32 1, %v854
        %v856 = vrot.slane %v847, %v855
        %v859 = vadd.f32 %v843, %v852
        %v860 = vadd.f32 %v844, %v856
        %v861 = vadd.f32 %v845, %v852
        %v862 = vadd.f32 %v846, %v856
        %vm863 = vcmp.ge.f32.partialorder %v859, 0.0
        %vm864 = vcmp.ge.f32.partialorder %v860, 0.0
        %vm865 = vcmp.ge.f32.partialorder %v861, 0.0
        %vm866 = vcmp.ge.f32.partialorder %v862, 0.0
        %v867 = vmul.f32 %v859, 0.01
        %v868 = vmul.f32 %v860, 0.01
        %v869 = vmul.f32 %v861, 0.01
        %v870 = vmul.f32 %v862, 0.01
        %v871 = vsel %vm863, %v859, %v867
        %v872 = vsel %vm864, %v860, %v868
        %v873 = vsel %vm865, %v861, %v869
        %v874 = vsel %vm866, %v862, %v870
        %875 = vst [vmem:[%s232] sm:$0xff] %v871
        %876 = vst [vmem:[%s232 + $0x8] sm:$0xff] %v872
        %877 = vst [vmem:[%s232 + $0x10] sm:$0xff] %v873
        %878 = vst [vmem:[%s232 + $0x18] sm:$0xff] %v874
        %s879 = sand.u32 %s138, 1
        %s880 = scalar_lea.sflag [#allocation6], %s879
        %s881 = sand.u32 %s138, 1
        %s882 = smul.addr %s881, 32
        %s883 = scalar_lea.vmem [#allocation7], %s882
        // Predicated region
        $region45: #{tpu_custom_call.1} parent=39 // pred_check
          %p884 = pneg %p148
        $region46: #{tpu_custom_call.1} parent=39 // pred_check_branch
          %886 = sbr.rel (%p884) target = $region48
        $region47: #{tpu_custom_call.1} parent=39 // pred_region
          %s888 = ssub.s32 512, 512
          %889 = vsyncadd %s880, %s888
          %s890 = smul.addr %s20, 4
          %s891 = smul.addr %s890, 128
          %s892 = scalar_lea.hbm %s5, %s891
          %s893 = sshll.u32 %s883, 4
          %s894 = int_to_ptr.vmem [resolvable:$true] %s893
          %899 = dma.vmem_to_hbm [thread:$0]  %s894, 512, %s892, %s880, 256, 256, 16
        $region48: #{tpu_custom_call.1} parent=39 // pred_fallthru
          _
      $region40: #{tpu_custom_call.1} parent=5 // pred_fallthru
        _
      %p900 = scmp.le.s32.totalorder 2, %s15
      // Predicated region
      $region49: #{tpu_custom_call.1} parent=5 // pred_check
        %p901 = pneg %p900
      $region50: #{tpu_custom_call.1} parent=5 // pred_check_branch
        %903 = sbr.rel (%p901) target = $region52
      $region51: #{tpu_custom_call.1} parent=5 // pred_region
        %s904 = ssub.s32 %s15, 2
        // Predicated region
        $region53: #{tpu_custom_call.1} parent=51 // pred_check
          %p905 = pneg %p154
        $region54: #{tpu_custom_call.1} parent=51 // pred_check_branch
          %907 = sbr.rel (%p905) target = $region56
        $region55: #{tpu_custom_call.1} parent=51 // pred_region
          %s908 = sand.u32 %s139, 1
          %s909 = scalar_lea.sflag [#allocation6], %s908
          %s910 = sand.u32 %s139, 1
          %s911 = smul.addr %s910, 32
          %s912 = scalar_lea.vmem [#allocation7], %s911
          %913 = dma.done %s909, 512
        $region56: #{tpu_custom_call.1} parent=51 // pred_fallthru
          _
      $region52: #{tpu_custom_call.1} parent=5 // pred_fallthru
        _
    $region6: #{tpu_custom_call.1} parent=1 // loop_footer
      %s19 = sadd.s32 1, %s15
    $region7: #{tpu_custom_call.1} parent=1 // loop_footer_branch
      %14 = sbr.rel target = $region3
    $region8: #{tpu_custom_call.1} parent=1 // loop_exit
      _
    %914 = vsyncpa [#allocation5], 1
    %s915 = scalar_lea.sflag [#allocation5], 1
    %916 = vsyncpa %s915, 1
    %917 = vsyncpa [#allocation6], 1
    %s918 = scalar_lea.sflag [#allocation6], 1
    %919 = vsyncpa %s918, 1

</llo_original>
